<compile_context>
chip_gen: v7x
topology: tpu7x:2x2x1
jax: 0.10.0
libtpu: 0.0.40
codegen_flags: <defaults>
</compile_context>

<pallas_src>
import jax
import jax.numpy as jnp
from jax import lax
from jax.experimental import pallas as pl
from jax.experimental.pallas import tpu as pltpu

INPUT_SIZE = 1
HIDDEN = 32


def rnn_kernel(z_ref, h0_ref, w_hh_ref, w_out_ref, b_out_ref,
               y_ref, hT_ref, h_all_ref):
    """Elman RNN (tanh) recurrence + batched Linear(32,1) epilogue, all in VMEM.

    z_ref:     (T, B, H)  precomputed x @ W_ih^T + (b_ih + b_hh), time-major
    h0_ref:    (B, H)     initial hidden state
    w_hh_ref:  (H, H)     == W_hh^T
    w_out_ref: (1, H)     Linear weight (row vector)
    b_out_ref: (1, 1)     Linear bias
    y_ref:     (T, B)     per-step scalar outputs (lane-dense slab, one store)
    hT_ref:    (B, H)     final hidden state
    h_all_ref: (T, B, H)  VMEM scratch holding every hidden state
    """
    T = z_ref.shape[0]
    w_hh = w_hh_ref[...]                                  # hoist weight load

    def step(t, h):
        # Critical serial chain: matmul + add + tanh only.
        h_new = jnp.tanh(z_ref[t] +
                         jnp.dot(h, w_hh, preferred_element_type=jnp.float32))
        h_all_ref[t] = h_new                              # off the dep chain
        return h_new

    h_final = lax.fori_loop(0, T, step, h0_ref[...], unroll=True)
    hT_ref[...] = h_final

    # Output projection for ALL timesteps at once (single XLU reduce + store).
    y_ref[...] = (jnp.sum(h_all_ref[...] * w_out_ref[...], axis=-1)
                  + b_out_ref[...])                       # (T, B)


def init_params(key):
    """Deterministic init mimicking PyTorch's U(-1/sqrt(H), 1/sqrt(H))."""
    k = 1.0 / jnp.sqrt(jnp.float32(HIDDEN))
    ks = jax.random.split(key, 6)
    u = lambda kk, shape: jax.random.uniform(kk, shape, jnp.float32, -k, k)
    return dict(
        w_ih=u(ks[0], (HIDDEN, INPUT_SIZE)),   # weight_ih_l0
        w_hh=u(ks[1], (HIDDEN, HIDDEN)),       # weight_hh_l0
        b_ih=u(ks[2], (HIDDEN,)),              # bias_ih_l0
        b_hh=u(ks[3], (HIDDEN,)),              # bias_hh_l0
        w_out=u(ks[4], (1, HIDDEN)),           # Linear.weight
        b_out=u(ks[5], (1,)),                  # Linear.bias
    )


def rnn_forward(x, h_state, params):
    """x: (B, T, I) batch_first, h_state: (1, B, H) or None.

    Returns (outs, h_state_new) with outs (B, T, 1), h_state_new (1, B, H),
    matching the PyTorch module's forward.
    """
    B, T, I = x.shape
    assert I == INPUT_SIZE

    h0 = (jnp.zeros((B, HIDDEN), jnp.float32) if h_state is None
          else h_state[0].astype(jnp.float32))

    # Hoisted input projection + combined bias for all timesteps (one fused
    # XLA op; the transpose fuses into it).  General in I (no I==1 trick).
    x_tm = jnp.transpose(x, (1, 0, 2)).astype(jnp.float32)            # (T,B,I)
    z = (jnp.einsum("tbi,hi->tbh", x_tm, params["w_ih"].astype(jnp.float32))
         + (params["b_ih"] + params["b_hh"]).reshape(1, 1, HIDDEN))   # (T,B,H)

    w_hh_t = params["w_hh"].T.astype(jnp.float32)          # (H, H)
    w_out_r = params["w_out"].reshape(1, HIDDEN).astype(jnp.float32)  # (1, H)
    b_out_r = params["b_out"].reshape(1, 1).astype(jnp.float32)       # (1, 1)

    vmem = pl.BlockSpec(memory_space=pltpu.MemorySpace.VMEM)
    y_tb, hT = pl.pallas_call(
        rnn_kernel,
        out_shape=(jax.ShapeDtypeStruct((T, B), jnp.float32),
                   jax.ShapeDtypeStruct((B, HIDDEN), jnp.float32)),
        in_specs=[vmem] * 5,
        out_specs=(vmem, vmem),
        scratch_shapes=[pltpu.VMEM((T, B, HIDDEN), jnp.float32)],
    )(z, h0, w_hh_t, w_out_r, b_out_r)

    y = jnp.transpose(y_tb)[:, :, None]                    # (B, T, 1)
    return y, hT[None]                                     # (1, B, H)


def rnn_reference(x, h_state, params):
    """Pure-JAX reference matching torch.nn.RNN(tanh) + Linear semantics."""
    B, T, I = x.shape
    h = (jnp.zeros((B, HIDDEN), jnp.float32) if h_state is None
         else h_state[0].astype(jnp.float32))
    w_ih, w_hh = params["w_ih"], params["w_hh"]
    b_ih, b_hh = params["b_ih"], params["b_hh"]
    w_out, b_out = params["w_out"], params["b_out"]

    def step(h, x_t):
        h_new = jnp.tanh(x_t @ w_ih.T + b_ih + h @ w_hh.T + b_hh)
        y = h_new @ w_out.T + b_out
        return h_new, y

    hT, ys = lax.scan(step, h, jnp.transpose(x, (1, 0, 2)).astype(jnp.float32))
    return jnp.transpose(ys, (1, 0, 2)), hT[None]


if __name__ == "__main__":
    key = jax.random.PRNGKey(0)
    pkey, xkey = jax.random.split(key)

    params = init_params(pkey)

    B, T = 2, 8                                   # batch=2, seq=8, input=1
    x = jax.random.normal(xkey, (B, T, INPUT_SIZE), jnp.float32)
    h_state = None                                # same as the PyTorch script

    y, h_new = rnn_forward(x, h_state, params)
    y = jax.block_until_ready(y)
    h_new = jax.block_until_ready(h_new)

    y_ref, h_ref = rnn_reference(x, h_state, params)

    assert y.shape == (B, T, 1) and h_new.shape == (1, B, HIDDEN)
    assert jnp.allclose(y, y_ref, atol=1e-5, rtol=1e-5)
    assert jnp.allclose(h_new, h_ref, atol=1e-5, rtol=1e-5)

    print("KERNEL_OK")
</pallas_src>

<mosaic_0001>
module attributes {stable_mosaic.version = 11 : i64} {
  func.func @rnn_kernel(%arg0: memref<8x2x32xf32, #tpu.memory_space<vmem>>, %arg1: memref<2x32xf32, #tpu.memory_space<vmem>>, %arg2: memref<32x32xf32, #tpu.memory_space<vmem>>, %arg3: memref<1x32xf32, #tpu.memory_space<vmem>>, %arg4: memref<1x1xf32, #tpu.memory_space<vmem>>, %arg5: memref<8x2xf32, #tpu.memory_space<vmem>>, %arg6: memref<2x32xf32, #tpu.memory_space<vmem>>, %arg7: memref<8x2x32xf32, #tpu.memory_space<vmem>>) attributes {dimension_semantics = [], scalar_prefetch = 0 : i64, scratch_operands = 1 : i64, tpu.core_type = #tpu.core_type<tc>} {
    %c0 = arith.constant 0 : index
    %c0_0 = arith.constant 0 : index
    %0 = vector.load %arg2[%c0, %c0_0] : memref<32x32xf32, #tpu.memory_space<vmem>>, vector<32x32xf32>
    %c0_1 = arith.constant 0 : index
    %c0_2 = arith.constant 0 : index
    %1 = vector.load %arg1[%c0_1, %c0_2] : memref<2x32xf32, #tpu.memory_space<vmem>>, vector<2x32xf32>
    %c0_i32 = arith.constant 0 : i32
    %2 = arith.index_cast %c0_i32 : i32 to index
    %c0_3 = arith.constant 0 : index
    %c0_4 = arith.constant 0 : index
    %3 = vector.load %arg0[%2, %c0_3, %c0_4] : memref<8x2x32xf32, #tpu.memory_space<vmem>>, vector<1x2x32xf32>
    %4 = vector.shape_cast %3 : vector<1x2x32xf32> to vector<2x32xf32>
    %cst = arith.constant dense<0.000000e+00> : vector<2x32xf32>
    %5 = tpu.matmul %1, %0, %cst {dimension_numbers = #tpu.dot_dimension_numbers<[1], [0], [0], [1], [0, 0, 1, 1], [], []>} : vector<2x32xf32>, vector<32x32xf32>, vector<2x32xf32> -> vector<2x32xf32>
    %6 = arith.addf %4, %5 : vector<2x32xf32>
    %7 = math.tanh %6 : vector<2x32xf32>
    %8 = arith.index_cast %c0_i32 : i32 to index
    %c0_5 = arith.constant 0 : index
    %c0_6 = arith.constant 0 : index
    %9 = vector.load %arg7[%8, %c0_5, %c0_6] : memref<8x2x32xf32, #tpu.memory_space<vmem>>, vector<1x2x32xf32>
    %10 = vector.shape_cast %9 : vector<1x2x32xf32> to vector<2x32xf32>
    %11 = vector.shape_cast %7 : vector<2x32xf32> to vector<1x2x32xf32>
    tpu.vector_store %arg7[%8, %c0_5, %c0_6], %11 {strides = array<i32>} : memref<8x2x32xf32, #tpu.memory_space<vmem>>, vector<1x2x32xf32>,
    %c1_i32 = arith.constant 1 : i32
    %12 = arith.index_cast %c1_i32 : i32 to index
    %c0_7 = arith.constant 0 : index
    %c0_8 = arith.constant 0 : index
    %13 = vector.load %arg0[%12, %c0_7, %c0_8] : memref<8x2x32xf32, #tpu.memory_space<vmem>>, vector<1x2x32xf32>
    %14 = vector.shape_cast %13 : vector<1x2x32xf32> to vector<2x32xf32>
    %cst_9 = arith.constant dense<0.000000e+00> : vector<2x32xf32>
    %15 = tpu.matmul %7, %0, %cst_9 {dimension_numbers = #tpu.dot_dimension_numbers<[1], [0], [0], [1], [0, 0, 1, 1], [], []>} : vector<2x32xf32>, vector<32x32xf32>, vector<2x32xf32> -> vector<2x32xf32>
    %16 = arith.addf %14, %15 : vector<2x32xf32>
    %17 = math.tanh %16 : vector<2x32xf32>
    %18 = arith.index_cast %c1_i32 : i32 to index
    %c0_10 = arith.constant 0 : index
    %c0_11 = arith.constant 0 : index
    %19 = vector.load %arg7[%18, %c0_10, %c0_11] : memref<8x2x32xf32, #tpu.memory_space<vmem>>, vector<1x2x32xf32>
    %20 = vector.shape_cast %19 : vector<1x2x32xf32> to vector<2x32xf32>
    %21 = vector.shape_cast %17 : vector<2x32xf32> to vector<1x2x32xf32>
    tpu.vector_store %arg7[%18, %c0_10, %c0_11], %21 {strides = array<i32>} : memref<8x2x32xf32, #tpu.memory_space<vmem>>, vector<1x2x32xf32>,
    %c2_i32 = arith.constant 2 : i32
    %22 = arith.index_cast %c2_i32 : i32 to index
    %c0_12 = arith.constant 0 : index
    %c0_13 = arith.constant 0 : index
    %23 = vector.load %arg0[%22, %c0_12, %c0_13] : memref<8x2x32xf32, #tpu.memory_space<vmem>>, vector<1x2x32xf32>
    %24 = vector.shape_cast %23 : vector<1x2x32xf32> to vector<2x32xf32>
    %cst_14 = arith.constant dense<0.000000e+00> : vector<2x32xf32>
    %25 = tpu.matmul %17, %0, %cst_14 {dimension_numbers = #tpu.dot_dimension_numbers<[1], [0], [0], [1], [0, 0, 1, 1], [], []>} : vector<2x32xf32>, vector<32x32xf32>, vector<2x32xf32> -> vector<2x32xf32>
    %26 = arith.addf %24, %25 : vector<2x32xf32>
    %27 = math.tanh %26 : vector<2x32xf32>
    %28 = arith.index_cast %c2_i32 : i32 to index
    %c0_15 = arith.constant 0 : index
    %c0_16 = arith.constant 0 : index
    %29 = vector.load %arg7[%28, %c0_15, %c0_16] : memref<8x2x32xf32, #tpu.memory_space<vmem>>, vector<1x2x32xf32>
    %30 = vector.shape_cast %29 : vector<1x2x32xf32> to vector<2x32xf32>
    %31 = vector.shape_cast %27 : vector<2x32xf32> to vector<1x2x32xf32>
    tpu.vector_store %arg7[%28, %c0_15, %c0_16], %31 {strides = array<i32>} : memref<8x2x32xf32, #tpu.memory_space<vmem>>, vector<1x2x32xf32>,
    %c3_i32 = arith.constant 3 : i32
    %32 = arith.index_cast %c3_i32 : i32 to index
    %c0_17 = arith.constant 0 : index
    %c0_18 = arith.constant 0 : index
    %33 = vector.load %arg0[%32, %c0_17, %c0_18] : memref<8x2x32xf32, #tpu.memory_space<vmem>>, vector<1x2x32xf32>
    %34 = vector.shape_cast %33 : vector<1x2x32xf32> to vector<2x32xf32>
    %cst_19 = arith.constant dense<0.000000e+00> : vector<2x32xf32>
    %35 = tpu.matmul %27, %0, %cst_19 {dimension_numbers = #tpu.dot_dimension_numbers<[1], [0], [0], [1], [0, 0, 1, 1], [], []>} : vector<2x32xf32>, vector<32x32xf32>, vector<2x32xf32> -> vector<2x32xf32>
    %36 = arith.addf %34, %35 : vector<2x32xf32>
    %37 = math.tanh %36 : vector<2x32xf32>
    %38 = arith.index_cast %c3_i32 : i32 to index
    %c0_20 = arith.constant 0 : index
    %c0_21 = arith.constant 0 : index
    %39 = vector.load %arg7[%38, %c0_20, %c0_21] : memref<8x2x32xf32, #tpu.memory_space<vmem>>, vector<1x2x32xf32>
    %40 = vector.shape_cast %39 : vector<1x2x32xf32> to vector<2x32xf32>
    %41 = vector.shape_cast %37 : vector<2x32xf32> to vector<1x2x32xf32>
    tpu.vector_store %arg7[%38, %c0_20, %c0_21], %41 {strides = array<i32>} : memref<8x2x32xf32, #tpu.memory_space<vmem>>, vector<1x2x32xf32>,
    %c4_i32 = arith.constant 4 : i32
    %42 = arith.index_cast %c4_i32 : i32 to index
    %c0_22 = arith.constant 0 : index
    %c0_23 = arith.constant 0 : index
    %43 = vector.load %arg0[%42, %c0_22, %c0_23] : memref<8x2x32xf32, #tpu.memory_space<vmem>>, vector<1x2x32xf32>
    %44 = vector.shape_cast %43 : vector<1x2x32xf32> to vector<2x32xf32>
    %cst_24 = arith.constant dense<0.000000e+00> : vector<2x32xf32>
    %45 = tpu.matmul %37, %0, %cst_24 {dimension_numbers = #tpu.dot_dimension_numbers<[1], [0], [0], [1], [0, 0, 1, 1], [], []>} : vector<2x32xf32>, vector<32x32xf32>, vector<2x32xf32> -> vector<2x32xf32>
    %46 = arith.addf %44, %45 : vector<2x32xf32>
    %47 = math.tanh %46 : vector<2x32xf32>
    %48 = arith.index_cast %c4_i32 : i32 to index
    %c0_25 = arith.constant 0 : index
    %c0_26 = arith.constant 0 : index
    %49 = vector.load %arg7[%48, %c0_25, %c0_26] : memref<8x2x32xf32, #tpu.memory_space<vmem>>, vector<1x2x32xf32>
    %50 = vector.shape_cast %49 : vector<1x2x32xf32> to vector<2x32xf32>
    %51 = vector.shape_cast %47 : vector<2x32xf32> to vector<1x2x32xf32>
    tpu.vector_store %arg7[%48, %c0_25, %c0_26], %51 {strides = array<i32>} : memref<8x2x32xf32, #tpu.memory_space<vmem>>, vector<1x2x32xf32>,
    %c5_i32 = arith.constant 5 : i32
    %52 = arith.index_cast %c5_i32 : i32 to index
    %c0_27 = arith.constant 0 : index
    %c0_28 = arith.constant 0 : index
    %53 = vector.load %arg0[%52, %c0_27, %c0_28] : memref<8x2x32xf32, #tpu.memory_space<vmem>>, vector<1x2x32xf32>
    %54 = vector.shape_cast %53 : vector<1x2x32xf32> to vector<2x32xf32>
    %cst_29 = arith.constant dense<0.000000e+00> : vector<2x32xf32>
    %55 = tpu.matmul %47, %0, %cst_29 {dimension_numbers = #tpu.dot_dimension_numbers<[1], [0], [0], [1], [0, 0, 1, 1], [], []>} : vector<2x32xf32>, vector<32x32xf32>, vector<2x32xf32> -> vector<2x32xf32>
    %56 = arith.addf %54, %55 : vector<2x32xf32>
    %57 = math.tanh %56 : vector<2x32xf32>
    %58 = arith.index_cast %c5_i32 : i32 to index
    %c0_30 = arith.constant 0 : index
    %c0_31 = arith.constant 0 : index
    %59 = vector.load %arg7[%58, %c0_30, %c0_31] : memref<8x2x32xf32, #tpu.memory_space<vmem>>, vector<1x2x32xf32>
    %60 = vector.shape_cast %59 : vector<1x2x32xf32> to vector<2x32xf32>
    %61 = vector.shape_cast %57 : vector<2x32xf32> to vector<1x2x32xf32>
    tpu.vector_store %arg7[%58, %c0_30, %c0_31], %61 {strides = array<i32>} : memref<8x2x32xf32, #tpu.memory_space<vmem>>, vector<1x2x32xf32>,
    %c6_i32 = arith.constant 6 : i32
    %62 = arith.index_cast %c6_i32 : i32 to index
    %c0_32 = arith.constant 0 : index
    %c0_33 = arith.constant 0 : index
    %63 = vector.load %arg0[%62, %c0_32, %c0_33] : memref<8x2x32xf32, #tpu.memory_space<vmem>>, vector<1x2x32xf32>
    %64 = vector.shape_cast %63 : vector<1x2x32xf32> to vector<2x32xf32>
    %cst_34 = arith.constant dense<0.000000e+00> : vector<2x32xf32>
    %65 = tpu.matmul %57, %0, %cst_34 {dimension_numbers = #tpu.dot_dimension_numbers<[1], [0], [0], [1], [0, 0, 1, 1], [], []>} : vector<2x32xf32>, vector<32x32xf32>, vector<2x32xf32> -> vector<2x32xf32>
    %66 = arith.addf %64, %65 : vector<2x32xf32>
    %67 = math.tanh %66 : vector<2x32xf32>
    %68 = arith.index_cast %c6_i32 : i32 to index
    %c0_35 = arith.constant 0 : index
    %c0_36 = arith.constant 0 : index
    %69 = vector.load %arg7[%68, %c0_35, %c0_36] : memref<8x2x32xf32, #tpu.memory_space<vmem>>, vector<1x2x32xf32>
    %70 = vector.shape_cast %69 : vector<1x2x32xf32> to vector<2x32xf32>
    %71 = vector.shape_cast %67 : vector<2x32xf32> to vector<1x2x32xf32>
    tpu.vector_store %arg7[%68, %c0_35, %c0_36], %71 {strides = array<i32>} : memref<8x2x32xf32, #tpu.memory_space<vmem>>, vector<1x2x32xf32>,
    %c7_i32 = arith.constant 7 : i32
    %72 = arith.index_cast %c7_i32 : i32 to index
    %c0_37 = arith.constant 0 : index
    %c0_38 = arith.constant 0 : index
    %73 = vector.load %arg0[%72, %c0_37, %c0_38] : memref<8x2x32xf32, #tpu.memory_space<vmem>>, vector<1x2x32xf32>
    %74 = vector.shape_cast %73 : vector<1x2x32xf32> to vector<2x32xf32>
    %cst_39 = arith.constant dense<0.000000e+00> : vector<2x32xf32>
    %75 = tpu.matmul %67, %0, %cst_39 {dimension_numbers = #tpu.dot_dimension_numbers<[1], [0], [0], [1], [0, 0, 1, 1], [], []>} : vector<2x32xf32>, vector<32x32xf32>, vector<2x32xf32> -> vector<2x32xf32>
    %76 = arith.addf %74, %75 : vector<2x32xf32>
    %77 = math.tanh %76 : vector<2x32xf32>
    %78 = arith.index_cast %c7_i32 : i32 to index
    %c0_40 = arith.constant 0 : index
    %c0_41 = arith.constant 0 : index
    %79 = vector.load %arg7[%78, %c0_40, %c0_41] : memref<8x2x32xf32, #tpu.memory_space<vmem>>, vector<1x2x32xf32>
    %80 = vector.shape_cast %79 : vector<1x2x32xf32> to vector<2x32xf32>
    %81 = vector.shape_cast %77 : vector<2x32xf32> to vector<1x2x32xf32>
    tpu.vector_store %arg7[%78, %c0_40, %c0_41], %81 {strides = array<i32>} : memref<8x2x32xf32, #tpu.memory_space<vmem>>, vector<1x2x32xf32>,
    %c8_i32 = arith.constant 8 : i32
    %c0_42 = arith.constant 0 : index
    %c0_43 = arith.constant 0 : index
    %82 = vector.load %arg6[%c0_42, %c0_43] : memref<2x32xf32, #tpu.memory_space<vmem>>, vector<2x32xf32>
    tpu.vector_store %arg6[%c0_42, %c0_43], %77 {strides = array<i32>} : memref<2x32xf32, #tpu.memory_space<vmem>>, vector<2x32xf32>,
    %c0_44 = arith.constant 0 : index
    %c0_45 = arith.constant 0 : index
    %c0_46 = arith.constant 0 : index
    %83 = vector.load %arg7[%c0_44, %c0_45, %c0_46] : memref<8x2x32xf32, #tpu.memory_space<vmem>>, vector<8x2x32xf32>
    %c0_47 = arith.constant 0 : index
    %c0_48 = arith.constant 0 : index
    %84 = vector.load %arg3[%c0_47, %c0_48] : memref<1x32xf32, #tpu.memory_space<vmem>>, vector<1x32xf32>
    %85 = vector.shape_cast %84 : vector<1x32xf32> to vector<1x1x32xf32>
    %86 = vector.broadcast %85 : vector<1x1x32xf32> to vector<8x2x32xf32>
    %87 = arith.mulf %83, %86 : vector<8x2x32xf32>
    %cst_49 = arith.constant dense<0.000000e+00> : vector<8x2xf32>
    %88 = vector.multi_reduction <add>, %87, %cst_49 [2] : vector<8x2x32xf32> to vector<8x2xf32>
    %c0_50 = arith.constant 0 : index
    %c0_51 = arith.constant 0 : index
    %89 = vector.load %arg4[%c0_50, %c0_51] : memref<1x1xf32, #tpu.memory_space<vmem>>, vector<1x1xf32>
    %90 = vector.broadcast %89 : vector<1x1xf32> to vector<8x2xf32>
    %91 = arith.addf %88, %90 : vector<8x2xf32>
    %c0_52 = arith.constant 0 : index
    %c0_53 = arith.constant 0 : index
    %92 = vector.load %arg5[%c0_52, %c0_53] : memref<8x2xf32, #tpu.memory_space<vmem>>, vector<8x2xf32>
    tpu.vector_store %arg5[%c0_52, %c0_53], %91 {strides = array<i32>} : memref<8x2xf32, #tpu.memory_space<vmem>>, vector<8x2xf32>,
    return
  }
}

</mosaic_0001>

<llo_original>
// kernel: tpu_custom_call.1
$region0: #{tpu_custom_call.1}
  #allocation0 [shape = 'u32[]', space=smem, size = 0x4, offset = 0x4, fixed_abs, tag = 'smem constant byte address 0x4 - core index']
  #allocation1 [shape = 'u32[144,128]{1,0:T(1,128)}', space=vmem, size = 0x12000, scoped, tag = 'internal scratch']
  #allocation2 [shape = 'f32[8,2,32]{2,1,0:T(2,128)}', space=vmem, size = 0x2000, scoped, tag = 'scratch operand']
  #allocation3 [shape = 'f32[1,1]{1,0:T(1,128)S(1)}', space=vmem, size = 0x200, scoped, tag = 'scoped memory for tpu_custom_call.1']
  %s0 = inlined_call_operand.hbm [shape: f32[8,2,32], index: 0, kind: input, shape index: {}]
  %s1 = inlined_call_operand.vmem [shape: f32[2,32], index: 1, kind: input, shape index: {}]
  %s2 = inlined_call_operand.hbm [shape: f32[32,32], index: 2, kind: input, shape index: {}]
  %s3 = inlined_call_operand.vmem [shape: f32[1,32], index: 3, kind: input, shape index: {}]
  %s4 = inlined_call_operand.<no memory space> [shape: f32[1,1], index: 4, kind: input, shape index: {}]
  %s5 = inlined_call_operand.vmem [shape: f32[8,2], index: 5, kind: output, shape index: {0}]
  %s6 = inlined_call_operand.hbm [shape: f32[2,32], index: 6, kind: output, shape index: {1}]
  %7 = xla_tuple %s5, %s6
  %s8 = sld [smem:[#allocation0]]
  $region46: #{tpu_custom_call.1} parent=0
    _
  %s10 = ssub.s32 1, %s8
  %s11 = scalar_select 0, %s10, %s8
  %v12 = vstv %s4
  %13 = vst [vmem:[#allocation3] sm:$0x1] %v12
  $region1: #{tpu_custom_call.1} parent=0
    #allocation4 [shape = 'u8[8192]{0}', space=vmem, size = 0x2000, scoped, tag = 'input window, operand 0, single buffered']
    #allocation5 [shape = 's32[1]{0}', space=sflag, size = 0x4, scoped, tag = 'scoped memory for tpu_custom_call.1']
    #allocation6 [shape = 's32[1]{0}', space=sflag, size = 0x4, scoped, tag = 'scoped memory for tpu_custom_call.1']
    #allocation7 [shape = 'u8[16384]{0}', space=vmem, size = 0x4000, scoped, tag = 'input window, operand 2, single buffered']
    #allocation8 [shape = 's32[1]{0}', space=sflag, size = 0x4, scoped, tag = 'scoped memory for tpu_custom_call.1']
    #allocation9 [shape = 'u8[1024]{0}', space=vmem, size = 0x400, scoped, tag = 'output window, operand 1, single buffered']
    %14 = vsyncpa [#allocation5], 0
    %15 = vsyncpa [#allocation8], 0
    %16 = vsyncpa [#allocation6], 0
    // Predicated region
    $region2: #{tpu_custom_call.1} parent=1 // pred_check
      _
    $region3: #{tpu_custom_call.1} parent=1 // pred_check_branch
      %18 = sbr.rel (0) target = $region5
    $region4: #{tpu_custom_call.1} parent=1 // pred_region
      %s20 = ssub.s32 256, 256
      %21 = vsyncadd [#allocation5], %s20
      %s22 = sshll.u32 [#allocation4], 4
      %s23 = int_to_ptr.vmem [resolvable:$true] %s22
      %28 = dma.hbm_to_vmem [thread:$0]  %s0, 256, %s23, [#allocation5], 32, 32, 2
    $region5: #{tpu_custom_call.1} parent=1 // pred_fallthru
      _
    // Predicated region
    $region6: #{tpu_custom_call.1} parent=1 // pred_check
      _
    $region7: #{tpu_custom_call.1} parent=1 // pred_check_branch
      %30 = sbr.rel (0) target = $region9
    $region8: #{tpu_custom_call.1} parent=1 // pred_region
      _
    $region9: #{tpu_custom_call.1} parent=1 // pred_fallthru
      _
    // Predicated region
    $region10: #{tpu_custom_call.1} parent=1 // pred_check
      _
    $region11: #{tpu_custom_call.1} parent=1 // pred_check_branch
      %32 = sbr.rel (0) target = $region13
    $region12: #{tpu_custom_call.1} parent=1 // pred_region
      %s34 = ssub.s32 512, 512
      %35 = vsyncadd [#allocation8], %s34
      %s36 = sshll.u32 [#allocation7], 4
      %s37 = int_to_ptr.vmem [resolvable:$true] %s36
      %42 = dma.hbm_to_vmem [thread:$0]  %s2, 512, %s37, [#allocation8], 128, 128, 8
    $region13: #{tpu_custom_call.1} parent=1 // pred_fallthru
      _
    // Predicated region
    $region14: #{tpu_custom_call.1} parent=1 // pred_check
      _
    $region15: #{tpu_custom_call.1} parent=1 // pred_check_branch
      %44 = sbr.rel (0) target = $region17
    $region16: #{tpu_custom_call.1} parent=1 // pred_region
      _
    $region17: #{tpu_custom_call.1} parent=1 // pred_fallthru
      _
    // Predicated region
    $region18: #{tpu_custom_call.1} parent=1 // pred_check
      _
    $region19: #{tpu_custom_call.1} parent=1 // pred_check_branch
      %46 = sbr.rel (0) target = $region21
    $region20: #{tpu_custom_call.1} parent=1 // pred_region
      _
    $region21: #{tpu_custom_call.1} parent=1 // pred_fallthru
      _
    // Predicated region
    $region22: #{tpu_custom_call.1} parent=1 // pred_check
      _
    $region23: #{tpu_custom_call.1} parent=1 // pred_check_branch
      %48 = sbr.rel (0) target = $region25
    $region24: #{tpu_custom_call.1} parent=1 // pred_region
      %49 = dma.done [#allocation5], 256
    $region25: #{tpu_custom_call.1} parent=1 // pred_fallthru
      _
    // Predicated region
    $region26: #{tpu_custom_call.1} parent=1 // pred_check
      _
    $region27: #{tpu_custom_call.1} parent=1 // pred_check_branch
      %51 = sbr.rel (0) target = $region29
    $region28: #{tpu_custom_call.1} parent=1 // pred_region
      %52 = dma.done [#allocation8], 512
    $region29: #{tpu_custom_call.1} parent=1 // pred_fallthru
      _
    %v53 = vld [vmem:[#allocation7] sm:$0xff]
    %v54 = vld [vmem:[#allocation7 + $0x8] sm:$0xff]
    %v55 = vld [vmem:[#allocation7 + $0x10] sm:$0xff]
    %v56 = vld [vmem:[#allocation7 + $0x18] sm:$0xff]
    %v57 = vld [vmem:[%s1] sm:$0x3]
    %v58 = vld [vmem:[#allocation4] sm:$0x3]
    %vm59 = vcmask 261120
    %v61 = vsel %vm59, %v57, 0
    %63 = vmatprep.subr.mxu0 0.0
    %64 = vmatpush1.msra.mxu0 %v53
    %65 = vmatprep.subr.mxu0 0.0
    %66 = vmatpush1.msra.mxu0 %v54
    %67 = vmatprep.subr.mxu0 0.0
    %68 = vmatpush1.msra.mxu0 %v55
    %69 = vmatprep.subr.mxu0 0.0
    %70 = vmatpush1.msra.mxu0 %v56
    %71 = vmatprep.subr.mxu0 0.0
    %72 = vmatpush1.msra.mxu0 0.0
    %73 = vmatprep.subr.mxu0 0.0
    %74 = vmatpush1.msra.mxu0 0.0
    %75 = vmatprep.subr.mxu0 0.0
    %76 = vmatpush1.msra.mxu0 0.0
    %77 = vmatprep.subr.mxu0 0.0
    %78 = vmatpush1.msra.mxu0 0.0
    %79 = vmatprep.subr.mxu0 0.0
    %80 = vmatpush1.msra.mxu0 0.0
    %81 = vmatprep.subr.mxu0 0.0
    %82 = vmatpush1.msra.mxu0 0.0
    %83 = vmatprep.subr.mxu0 0.0
    %84 = vmatpush1.msra.mxu0 0.0
    %85 = vmatprep.subr.mxu0 0.0
    %86 = vmatpush1.msra.mxu0 0.0
    %87 = vmatprep.subr.mxu0 0.0
    %88 = vmatpush1.msra.mxu0 0.0
    %89 = vmatprep.subr.mxu0 0.0
    %90 = vmatpush1.msra.mxu0 0.0
    %91 = vmatprep.subr.mxu0 0.0
    %92 = vmatpush1.msra.mxu0 0.0
    %93 = vmatprep.subr.mxu0 0.0
    %94 = vmatpush1.msra.mxu0 0.0
    %95 = vmatprep.subr.mxu0 0.0
    %96 = vmatpush1.msra.mxu0 0.0
    %97 = vmatprep.subr.mxu0 0.0
    %98 = vmatpush1.msra.mxu0 0.0
    %99 = vmatprep.subr.mxu0 0.0
    %100 = vmatpush1.msra.mxu0 0.0
    %101 = vmatprep.subr.mxu0 0.0
    %102 = vmatpush1.msra.mxu0 0.0
    %103 = vmatprep.subr.mxu0 0.0
    %104 = vmatpush1.msra.mxu0 0.0
    %105 = vmatprep.subr.mxu0 0.0
    %106 = vmatpush1.msra.mxu0 0.0
    %107 = vmatprep.subr.mxu0 0.0
    %108 = vmatpush1.msra.mxu0 0.0
    %109 = vmatprep.subr.mxu0 0.0
    %110 = vmatpush1.msra.mxu0 0.0
    %111 = vmatprep.subr.mxu0 0.0
    %112 = vmatpush1.msra.mxu0 0.0
    %113 = vmatprep.subr.mxu0 0.0
    %114 = vmatpush1.msra.mxu0 0.0
    %115 = vmatprep.subr.mxu0 0.0
    %116 = vmatpush1.msra.mxu0 0.0
    %117 = vmatprep.subr.mxu0 0.0
    %118 = vmatpush1.msra.mxu0 0.0
    %119 = vmatprep.subr.mxu0 0.0
    %120 = vmatpush1.msra.mxu0 0.0
    %121 = vmatprep.subr.mxu0 0.0
    %122 = vmatpush1.msra.mxu0 0.0
    %123 = vmatprep.subr.mxu0 0.0
    %124 = vmatpush1.msra.mxu0 0.0
    %125 = vmatprep.subr.mxu0 0.0
    %126 = vmatpush1.msra.mxu0 0.0
    %127 = vmatprep.mubr.f32.mxu0 0.0
    %128 = vmatmul.mubr.f32.gmra.mrb[0].mxu0 %v61
    %v129 = vpop.f32.mrb[0].mxu0
    %v130 = vadd.f32 0.0, %v129
    %v131 = vpop.f32.mrb[0].mxu0
    %132 = vdwg.mxu0
    %v133 = vadd.f32 %v58, %v130
    %v134 = vtanh.pop %v133
    %vm135 = vcmask 254976
    %136 = vst.msk [vmem:[#allocation2] sm:$0x3] %vm135, %v134
    %s137 = scalar_lea.vmem [#allocation4], 2
    %v138 = vld [vmem:[%s137] sm:$0x3]
    %v140 = vsel %vm59, %v134, 0
    %142 = vmatprep.subr.mxu0 0.0
    %143 = vmatpush1.msra.mxu0 %v53
    %144 = vmatprep.subr.mxu0 0.0
    %145 = vmatpush1.msra.mxu0 %v54
    %146 = vmatprep.subr.mxu0 0.0
    %147 = vmatpush1.msra.mxu0 %v55
    %148 = vmatprep.subr.mxu0 0.0
    %149 = vmatpush1.msra.mxu0 %v56
    %150 = vmatprep.subr.mxu0 0.0
    %151 = vmatpush1.msra.mxu0 0.0
    %152 = vmatprep.subr.mxu0 0.0
    %153 = vmatpush1.msra.mxu0 0.0
    %154 = vmatprep.subr.mxu0 0.0
    %155 = vmatpush1.msra.mxu0 0.0
    %156 = vmatprep.subr.mxu0 0.0
    %157 = vmatpush1.msra.mxu0 0.0
    %158 = vmatprep.subr.mxu0 0.0
    %159 = vmatpush1.msra.mxu0 0.0
    %160 = vmatprep.subr.mxu0 0.0
    %161 = vmatpush1.msra.mxu0 0.0
    %162 = vmatprep.subr.mxu0 0.0
    %163 = vmatpush1.msra.mxu0 0.0
    %164 = vmatprep.subr.mxu0 0.0
    %165 = vmatpush1.msra.mxu0 0.0
    %166 = vmatprep.subr.mxu0 0.0
    %167 = vmatpush1.msra.mxu0 0.0
    %168 = vmatprep.subr.mxu0 0.0
    %169 = vmatpush1.msra.mxu0 0.0
    %170 = vmatprep.subr.mxu0 0.0
    %171 = vmatpush1.msra.mxu0 0.0
    %172 = vmatprep.subr.mxu0 0.0
    %173 = vmatpush1.msra.mxu0 0.0
    %174 = vmatprep.subr.mxu0 0.0
    %175 = vmatpush1.msra.mxu0 0.0
    %176 = vmatprep.subr.mxu0 0.0
    %177 = vmatpush1.msra.mxu0 0.0
    %178 = vmatprep.subr.mxu0 0.0
    %179 = vmatpush1.msra.mxu0 0.0
    %180 = vmatprep.subr.mxu0 0.0
    %181 = vmatpush1.msra.mxu0 0.0
    %182 = vmatprep.subr.mxu0 0.0
    %183 = vmatpush1.msra.mxu0 0.0
    %184 = vmatprep.subr.mxu0 0.0
    %185 = vmatpush1.msra.mxu0 0.0
    %186 = vmatprep.subr.mxu0 0.0
    %187 = vmatpush1.msra.mxu0 0.0
    %188 = vmatprep.subr.mxu0 0.0
    %189 = vmatpush1.msra.mxu0 0.0
    %190 = vmatprep.subr.mxu0 0.0
    %191 = vmatpush1.msra.mxu0 0.0
    %192 = vmatprep.subr.mxu0 0.0
    %193 = vmatpush1.msra.mxu0 0.0
    %194 = vmatprep.subr.mxu0 0.0
    %195 = vmatpush1.msra.mxu0 0.0
    %196 = vmatprep.subr.mxu0 0.0
    %197 = vmatpush1.msra.mxu0 0.0
    %198 = vmatprep.subr.mxu0 0.0
    %199 = vmatpush1.msra.mxu0 0.0
    %200 = vmatprep.subr.mxu0 0.0
    %201 = vmatpush1.msra.mxu0 0.0
    %202 = vmatprep.subr.mxu0 0.0
    %203 = vmatpush1.msra.mxu0 0.0
    %204 = vmatprep.subr.mxu0 0.0
    %205 = vmatpush1.msra.mxu0 0.0
    %206 = vmatprep.mubr.f32.mxu0 0.0
    %207 = vmatmul.mubr.f32.gmra.mrb[0].mxu0 %v140
    %v208 = vpop.f32.mrb[0].mxu0
    %v209 = vadd.f32 0.0, %v208
    %v210 = vpop.f32.mrb[0].mxu0
    %211 = vdwg.mxu0
    %v212 = vadd.f32 %v138, %v209
    %v213 = vtanh.pop %v212
    %s214 = scalar_lea.vmem [#allocation2], 2
    %215 = vst.msk [vmem:[%s214] sm:$0x3] %vm135, %v213
    %s216 = scalar_lea.vmem [#allocation4], 4
    %v217 = vld [vmem:[%s216] sm:$0x3]
    %v219 = vsel %vm59, %v213, 0
    %221 = vmatprep.subr.mxu0 0.0
    %222 = vmatpush1.msra.mxu0 %v53
    %223 = vmatprep.subr.mxu0 0.0
    %224 = vmatpush1.msra.mxu0 %v54
    %225 = vmatprep.subr.mxu0 0.0
    %226 = vmatpush1.msra.mxu0 %v55
    %227 = vmatprep.subr.mxu0 0.0
    %228 = vmatpush1.msra.mxu0 %v56
    %229 = vmatprep.subr.mxu0 0.0
    %230 = vmatpush1.msra.mxu0 0.0
    %231 = vmatprep.subr.mxu0 0.0
    %232 = vmatpush1.msra.mxu0 0.0
    %233 = vmatprep.subr.mxu0 0.0
    %234 = vmatpush1.msra.mxu0 0.0
    %235 = vmatprep.subr.mxu0 0.0
    %236 = vmatpush1.msra.mxu0 0.0
    %237 = vmatprep.subr.mxu0 0.0
    %238 = vmatpush1.msra.mxu0 0.0
    %239 = vmatprep.subr.mxu0 0.0
    %240 = vmatpush1.msra.mxu0 0.0
    %241 = vmatprep.subr.mxu0 0.0
    %242 = vmatpush1.msra.mxu0 0.0
    %243 = vmatprep.subr.mxu0 0.0
    %244 = vmatpush1.msra.mxu0 0.0
    %245 = vmatprep.subr.mxu0 0.0
    %246 = vmatpush1.msra.mxu0 0.0
    %247 = vmatprep.subr.mxu0 0.0
    %248 = vmatpush1.msra.mxu0 0.0
    %249 = vmatprep.subr.mxu0 0.0
    %250 = vmatpush1.msra.mxu0 0.0
    %251 = vmatprep.subr.mxu0 0.0
    %252 = vmatpush1.msra.mxu0 0.0
    %253 = vmatprep.subr.mxu0 0.0
    %254 = vmatpush1.msra.mxu0 0.0
    %255 = vmatprep.subr.mxu0 0.0
    %256 = vmatpush1.msra.mxu0 0.0
    %257 = vmatprep.subr.mxu0 0.0
    %258 = vmatpush1.msra.mxu0 0.0
    %259 = vmatprep.subr.mxu0 0.0
    %260 = vmatpush1.msra.mxu0 0.0
    %261 = vmatprep.subr.mxu0 0.0
    %262 = vmatpush1.msra.mxu0 0.0
    %263 = vmatprep.subr.mxu0 0.0
    %264 = vmatpush1.msra.mxu0 0.0
    %265 = vmatprep.subr.mxu0 0.0
    %266 = vmatpush1.msra.mxu0 0.0
    %267 = vmatprep.subr.mxu0 0.0
    %268 = vmatpush1.msra.mxu0 0.0
    %269 = vmatprep.subr.mxu0 0.0
    %270 = vmatpush1.msra.mxu0 0.0
    %271 = vmatprep.subr.mxu0 0.0
    %272 = vmatpush1.msra.mxu0 0.0
    %273 = vmatprep.subr.mxu0 0.0
    %274 = vmatpush1.msra.mxu0 0.0
    %275 = vmatprep.subr.mxu0 0.0
    %276 = vmatpush1.msra.mxu0 0.0
    %277 = vmatprep.subr.mxu0 0.0
    %278 = vmatpush1.msra.mxu0 0.0
    %279 = vmatprep.subr.mxu0 0.0
    %280 = vmatpush1.msra.mxu0 0.0
    %281 = vmatprep.subr.mxu0 0.0
    %282 = vmatpush1.msra.mxu0 0.0
    %283 = vmatprep.subr.mxu0 0.0
    %284 = vmatpush1.msra.mxu0 0.0
    %285 = vmatprep.mubr.f32.mxu0 0.0
    %286 = vmatmul.mubr.f32.gmra.mrb[0].mxu0 %v219
    %v287 = vpop.f32.mrb[0].mxu0
    %v288 = vadd.f32 0.0, %v287
    %v289 = vpop.f32.mrb[0].mxu0
    %290 = vdwg.mxu0
    %v291 = vadd.f32 %v217, %v288
    %v292 = vtanh.pop %v291
    %s293 = scalar_lea.vmem [#allocation2], 4
    %294 = vst.msk [vmem:[%s293] sm:$0x3] %vm135, %v292
    %s295 = scalar_lea.vmem [#allocation4], 6
    %v296 = vld [vmem:[%s295] sm:$0x3]
    %v298 = vsel %vm59, %v292, 0
    %300 = vmatprep.subr.mxu0 0.0
    %301 = vmatpush1.msra.mxu0 %v53
    %302 = vmatprep.subr.mxu0 0.0
    %303 = vmatpush1.msra.mxu0 %v54
    %304 = vmatprep.subr.mxu0 0.0
    %305 = vmatpush1.msra.mxu0 %v55
    %306 = vmatprep.subr.mxu0 0.0
    %307 = vmatpush1.msra.mxu0 %v56
    %308 = vmatprep.subr.mxu0 0.0
    %309 = vmatpush1.msra.mxu0 0.0
    %310 = vmatprep.subr.mxu0 0.0
    %311 = vmatpush1.msra.mxu0 0.0
    %312 = vmatprep.subr.mxu0 0.0
    %313 = vmatpush1.msra.mxu0 0.0
    %314 = vmatprep.subr.mxu0 0.0
    %315 = vmatpush1.msra.mxu0 0.0
    %316 = vmatprep.subr.mxu0 0.0
    %317 = vmatpush1.msra.mxu0 0.0
    %318 = vmatprep.subr.mxu0 0.0
    %319 = vmatpush1.msra.mxu0 0.0
    %320 = vmatprep.subr.mxu0 0.0
    %321 = vmatpush1.msra.mxu0 0.0
    %322 = vmatprep.subr.mxu0 0.0
    %323 = vmatpush1.msra.mxu0 0.0
    %324 = vmatprep.subr.mxu0 0.0
    %325 = vmatpush1.msra.mxu0 0.0
    %326 = vmatprep.subr.mxu0 0.0
    %327 = vmatpush1.msra.mxu0 0.0
    %328 = vmatprep.subr.mxu0 0.0
    %329 = vmatpush1.msra.mxu0 0.0
    %330 = vmatprep.subr.mxu0 0.0
    %331 = vmatpush1.msra.mxu0 0.0
    %332 = vmatprep.subr.mxu0 0.0
    %333 = vmatpush1.msra.mxu0 0.0
    %334 = vmatprep.subr.mxu0 0.0
    %335 = vmatpush1.msra.mxu0 0.0
    %336 = vmatprep.subr.mxu0 0.0
    %337 = vmatpush1.msra.mxu0 0.0
    %338 = vmatprep.subr.mxu0 0.0
    %339 = vmatpush1.msra.mxu0 0.0
    %340 = vmatprep.subr.mxu0 0.0
    %341 = vmatpush1.msra.mxu0 0.0
    %342 = vmatprep.subr.mxu0 0.0
    %343 = vmatpush1.msra.mxu0 0.0
    %344 = vmatprep.subr.mxu0 0.0
    %345 = vmatpush1.msra.mxu0 0.0
    %346 = vmatprep.subr.mxu0 0.0
    %347 = vmatpush1.msra.mxu0 0.0
    %348 = vmatprep.subr.mxu0 0.0
    %349 = vmatpush1.msra.mxu0 0.0
    %350 = vmatprep.subr.mxu0 0.0
    %351 = vmatpush1.msra.mxu0 0.0
    %352 = vmatprep.subr.mxu0 0.0
    %353 = vmatpush1.msra.mxu0 0.0
    %354 = vmatprep.subr.mxu0 0.0
    %355 = vmatpush1.msra.mxu0 0.0
    %356 = vmatprep.subr.mxu0 0.0
    %357 = vmatpush1.msra.mxu0 0.0
    %358 = vmatprep.subr.mxu0 0.0
    %359 = vmatpush1.msra.mxu0 0.0
    %360 = vmatprep.subr.mxu0 0.0
    %361 = vmatpush1.msra.mxu0 0.0
    %362 = vmatprep.subr.mxu0 0.0
    %363 = vmatpush1.msra.mxu0 0.0
    %364 = vmatprep.mubr.f32.mxu0 0.0
    %365 = vmatmul.mubr.f32.gmra.mrb[0].mxu0 %v298
    %v366 = vpop.f32.mrb[0].mxu0
    %v367 = vadd.f32 0.0, %v366
    %v368 = vpop.f32.mrb[0].mxu0
    %369 = vdwg.mxu0
    %v370 = vadd.f32 %v296, %v367
    %v371 = vtanh.pop %v370
    %s372 = scalar_lea.vmem [#allocation2], 6
    %373 = vst.msk [vmem:[%s372] sm:$0x3] %vm135, %v371
    %s374 = scalar_lea.vmem [#allocation4], 8
    %v375 = vld [vmem:[%s374] sm:$0x3]
    %v377 = vsel %vm59, %v371, 0
    %379 = vmatprep.subr.mxu0 0.0
    %380 = vmatpush1.msra.mxu0 %v53
    %381 = vmatprep.subr.mxu0 0.0
    %382 = vmatpush1.msra.mxu0 %v54
    %383 = vmatprep.subr.mxu0 0.0
    %384 = vmatpush1.msra.mxu0 %v55
    %385 = vmatprep.subr.mxu0 0.0
    %386 = vmatpush1.msra.mxu0 %v56
    %387 = vmatprep.subr.mxu0 0.0
    %388 = vmatpush1.msra.mxu0 0.0
    %389 = vmatprep.subr.mxu0 0.0
    %390 = vmatpush1.msra.mxu0 0.0
    %391 = vmatprep.subr.mxu0 0.0
    %392 = vmatpush1.msra.mxu0 0.0
    %393 = vmatprep.subr.mxu0 0.0
    %394 = vmatpush1.msra.mxu0 0.0
    %395 = vmatprep.subr.mxu0 0.0
    %396 = vmatpush1.msra.mxu0 0.0
    %397 = vmatprep.subr.mxu0 0.0
    %398 = vmatpush1.msra.mxu0 0.0
    %399 = vmatprep.subr.mxu0 0.0
    %400 = vmatpush1.msra.mxu0 0.0
    %401 = vmatprep.subr.mxu0 0.0
    %402 = vmatpush1.msra.mxu0 0.0
    %403 = vmatprep.subr.mxu0 0.0
    %404 = vmatpush1.msra.mxu0 0.0
    %405 = vmatprep.subr.mxu0 0.0
    %406 = vmatpush1.msra.mxu0 0.0
    %407 = vmatprep.subr.mxu0 0.0
    %408 = vmatpush1.msra.mxu0 0.0
    %409 = vmatprep.subr.mxu0 0.0
    %410 = vmatpush1.msra.mxu0 0.0
    %411 = vmatprep.subr.mxu0 0.0
    %412 = vmatpush1.msra.mxu0 0.0
    %413 = vmatprep.subr.mxu0 0.0
    %414 = vmatpush1.msra.mxu0 0.0
    %415 = vmatprep.subr.mxu0 0.0
    %416 = vmatpush1.msra.mxu0 0.0
    %417 = vmatprep.subr.mxu0 0.0
    %418 = vmatpush1.msra.mxu0 0.0
    %419 = vmatprep.subr.mxu0 0.0
    %420 = vmatpush1.msra.mxu0 0.0
    %421 = vmatprep.subr.mxu0 0.0
    %422 = vmatpush1.msra.mxu0 0.0
    %423 = vmatprep.subr.mxu0 0.0
    %424 = vmatpush1.msra.mxu0 0.0
    %425 = vmatprep.subr.mxu0 0.0
    %426 = vmatpush1.msra.mxu0 0.0
    %427 = vmatprep.subr.mxu0 0.0
    %428 = vmatpush1.msra.mxu0 0.0
    %429 = vmatprep.subr.mxu0 0.0
    %430 = vmatpush1.msra.mxu0 0.0
    %431 = vmatprep.subr.mxu0 0.0
    %432 = vmatpush1.msra.mxu0 0.0
    %433 = vmatprep.subr.mxu0 0.0
    %434 = vmatpush1.msra.mxu0 0.0
    %435 = vmatprep.subr.mxu0 0.0
    %436 = vmatpush1.msra.mxu0 0.0
    %437 = vmatprep.subr.mxu0 0.0
    %438 = vmatpush1.msra.mxu0 0.0
    %439 = vmatprep.subr.mxu0 0.0
    %440 = vmatpush1.msra.mxu0 0.0
    %441 = vmatprep.subr.mxu0 0.0
    %442 = vmatpush1.msra.mxu0 0.0
    %443 = vmatprep.mubr.f32.mxu0 0.0
    %444 = vmatmul.mubr.f32.gmra.mrb[0].mxu0 %v377
    %v445 = vpop.f32.mrb[0].mxu0
    %v446 = vadd.f32 0.0, %v445
    %v447 = vpop.f32.mrb[0].mxu0
    %448 = vdwg.mxu0
    %v449 = vadd.f32 %v375, %v446
    %v450 = vtanh.pop %v449
    %s451 = scalar_lea.vmem [#allocation2], 8
    %452 = vst.msk [vmem:[%s451] sm:$0x3] %vm135, %v450
    %s453 = scalar_lea.vmem [#allocation4], 10
    %v454 = vld [vmem:[%s453] sm:$0x3]
    %v456 = vsel %vm59, %v450, 0
    %458 = vmatprep.subr.mxu0 0.0
    %459 = vmatpush1.msra.mxu0 %v53
    %460 = vmatprep.subr.mxu0 0.0
    %461 = vmatpush1.msra.mxu0 %v54
    %462 = vmatprep.subr.mxu0 0.0
    %463 = vmatpush1.msra.mxu0 %v55
    %464 = vmatprep.subr.mxu0 0.0
    %465 = vmatpush1.msra.mxu0 %v56
    %466 = vmatprep.subr.mxu0 0.0
    %467 = vmatpush1.msra.mxu0 0.0
    %468 = vmatprep.subr.mxu0 0.0
    %469 = vmatpush1.msra.mxu0 0.0
    %470 = vmatprep.subr.mxu0 0.0
    %471 = vmatpush1.msra.mxu0 0.0
    %472 = vmatprep.subr.mxu0 0.0
    %473 = vmatpush1.msra.mxu0 0.0
    %474 = vmatprep.subr.mxu0 0.0
    %475 = vmatpush1.msra.mxu0 0.0
    %476 = vmatprep.subr.mxu0 0.0
    %477 = vmatpush1.msra.mxu0 0.0
    %478 = vmatprep.subr.mxu0 0.0
    %479 = vmatpush1.msra.mxu0 0.0
    %480 = vmatprep.subr.mxu0 0.0
    %481 = vmatpush1.msra.mxu0 0.0
    %482 = vmatprep.subr.mxu0 0.0
    %483 = vmatpush1.msra.mxu0 0.0
    %484 = vmatprep.subr.mxu0 0.0
    %485 = vmatpush1.msra.mxu0 0.0
    %486 = vmatprep.subr.mxu0 0.0
    %487 = vmatpush1.msra.mxu0 0.0
    %488 = vmatprep.subr.mxu0 0.0
    %489 = vmatpush1.msra.mxu0 0.0
    %490 = vmatprep.subr.mxu0 0.0
    %491 = vmatpush1.msra.mxu0 0.0
    %492 = vmatprep.subr.mxu0 0.0
    %493 = vmatpush1.msra.mxu0 0.0
    %494 = vmatprep.subr.mxu0 0.0
    %495 = vmatpush1.msra.mxu0 0.0
    %496 = vmatprep.subr.mxu0 0.0
    %497 = vmatpush1.msra.mxu0 0.0
    %498 = vmatprep.subr.mxu0 0.0
    %499 = vmatpush1.msra.mxu0 0.0
    %500 = vmatprep.subr.mxu0 0.0
    %501 = vmatpush1.msra.mxu0 0.0
    %502 = vmatprep.subr.mxu0 0.0
    %503 = vmatpush1.msra.mxu0 0.0
    %504 = vmatprep.subr.mxu0 0.0
    %505 = vmatpush1.msra.mxu0 0.0
    %506 = vmatprep.subr.mxu0 0.0
    %507 = vmatpush1.msra.mxu0 0.0
    %508 = vmatprep.subr.mxu0 0.0
    %509 = vmatpush1.msra.mxu0 0.0
    %510 = vmatprep.subr.mxu0 0.0
    %511 = vmatpush1.msra.mxu0 0.0
    %512 = vmatprep.subr.mxu0 0.0
    %513 = vmatpush1.msra.mxu0 0.0
    %514 = vmatprep.subr.mxu0 0.0
    %515 = vmatpush1.msra.mxu0 0.0
    %516 = vmatprep.subr.mxu0 0.0
    %517 = vmatpush1.msra.mxu0 0.0
    %518 = vmatprep.subr.mxu0 0.0
    %519 = vmatpush1.msra.mxu0 0.0
    %520 = vmatprep.subr.mxu0 0.0
    %521 = vmatpush1.msra.mxu0 0.0
    %522 = vmatprep.mubr.f32.mxu0 0.0
    %523 = vmatmul.mubr.f32.gmra.mrb[0].mxu0 %v456
    %v524 = vpop.f32.mrb[0].mxu0
    %v525 = vadd.f32 0.0, %v524
    %v526 = vpop.f32.mrb[0].mxu0
    %527 = vdwg.mxu0
    %v528 = vadd.f32 %v454, %v525
    %v529 = vtanh.pop %v528
    %s530 = scalar_lea.vmem [#allocation2], 10
    %531 = vst.msk [vmem:[%s530] sm:$0x3] %vm135, %v529
    %s532 = scalar_lea.vmem [#allocation4], 12
    %v533 = vld [vmem:[%s532] sm:$0x3]
    %v535 = vsel %vm59, %v529, 0
    %537 = vmatprep.subr.mxu0 0.0
    %538 = vmatpush1.msra.mxu0 %v53
    %539 = vmatprep.subr.mxu0 0.0
    %540 = vmatpush1.msra.mxu0 %v54
    %541 = vmatprep.subr.mxu0 0.0
    %542 = vmatpush1.msra.mxu0 %v55
    %543 = vmatprep.subr.mxu0 0.0
    %544 = vmatpush1.msra.mxu0 %v56
    %545 = vmatprep.subr.mxu0 0.0
    %546 = vmatpush1.msra.mxu0 0.0
    %547 = vmatprep.subr.mxu0 0.0
    %548 = vmatpush1.msra.mxu0 0.0
    %549 = vmatprep.subr.mxu0 0.0
    %550 = vmatpush1.msra.mxu0 0.0
    %551 = vmatprep.subr.mxu0 0.0
    %552 = vmatpush1.msra.mxu0 0.0
    %553 = vmatprep.subr.mxu0 0.0
    %554 = vmatpush1.msra.mxu0 0.0
    %555 = vmatprep.subr.mxu0 0.0
    %556 = vmatpush1.msra.mxu0 0.0
    %557 = vmatprep.subr.mxu0 0.0
    %558 = vmatpush1.msra.mxu0 0.0
    %559 = vmatprep.subr.mxu0 0.0
    %560 = vmatpush1.msra.mxu0 0.0
    %561 = vmatprep.subr.mxu0 0.0
    %562 = vmatpush1.msra.mxu0 0.0
    %563 = vmatprep.subr.mxu0 0.0
    %564 = vmatpush1.msra.mxu0 0.0
    %565 = vmatprep.subr.mxu0 0.0
    %566 = vmatpush1.msra.mxu0 0.0
    %567 = vmatprep.subr.mxu0 0.0
    %568 = vmatpush1.msra.mxu0 0.0
    %569 = vmatprep.subr.mxu0 0.0
    %570 = vmatpush1.msra.mxu0 0.0
    %571 = vmatprep.subr.mxu0 0.0
    %572 = vmatpush1.msra.mxu0 0.0
    %573 = vmatprep.subr.mxu0 0.0
    %574 = vmatpush1.msra.mxu0 0.0
    %575 = vmatprep.subr.mxu0 0.0
    %576 = vmatpush1.msra.mxu0 0.0
    %577 = vmatprep.subr.mxu0 0.0
    %578 = vmatpush1.msra.mxu0 0.0
    %579 = vmatprep.subr.mxu0 0.0
    %580 = vmatpush1.msra.mxu0 0.0
    %581 = vmatprep.subr.mxu0 0.0
    %582 = vmatpush1.msra.mxu0 0.0
    %583 = vmatprep.subr.mxu0 0.0
    %584 = vmatpush1.msra.mxu0 0.0
    %585 = vmatprep.subr.mxu0 0.0
    %586 = vmatpush1.msra.mxu0 0.0
    %587 = vmatprep.subr.mxu0 0.0
    %588 = vmatpush1.msra.mxu0 0.0
    %589 = vmatprep.subr.mxu0 0.0
    %590 = vmatpush1.msra.mxu0 0.0
    %591 = vmatprep.subr.mxu0 0.0
    %592 = vmatpush1.msra.mxu0 0.0
    %593 = vmatprep.subr.mxu0 0.0
    %594 = vmatpush1.msra.mxu0 0.0
    %595 = vmatprep.subr.mxu0 0.0
    %596 = vmatpush1.msra.mxu0 0.0
    %597 = vmatprep.subr.mxu0 0.0
    %598 = vmatpush1.msra.mxu0 0.0
    %599 = vmatprep.subr.mxu0 0.0
    %600 = vmatpush1.msra.mxu0 0.0
    %601 = vmatprep.mubr.f32.mxu0 0.0
    %602 = vmatmul.mubr.f32.gmra.mrb[0].mxu0 %v535
    %v603 = vpop.f32.mrb[0].mxu0
    %v604 = vadd.f32 0.0, %v603
    %v605 = vpop.f32.mrb[0].mxu0
    %606 = vdwg.mxu0
    %v607 = vadd.f32 %v533, %v604
    %v608 = vtanh.pop %v607
    %s609 = scalar_lea.vmem [#allocation2], 12
    %610 = vst.msk [vmem:[%s609] sm:$0x3] %vm135, %v608
    %s611 = scalar_lea.vmem [#allocation4], 14
    %v612 = vld [vmem:[%s611] sm:$0x3]
    %v614 = vsel %vm59, %v608, 0
    %616 = vmatprep.subr.mxu0 0.0
    %617 = vmatpush1.msra.mxu0 %v53
    %618 = vmatprep.subr.mxu0 0.0
    %619 = vmatpush1.msra.mxu0 %v54
    %620 = vmatprep.subr.mxu0 0.0
    %621 = vmatpush1.msra.mxu0 %v55
    %622 = vmatprep.subr.mxu0 0.0
    %623 = vmatpush1.msra.mxu0 %v56
    %624 = vmatprep.subr.mxu0 0.0
    %625 = vmatpush1.msra.mxu0 0.0
    %626 = vmatprep.subr.mxu0 0.0
    %627 = vmatpush1.msra.mxu0 0.0
    %628 = vmatprep.subr.mxu0 0.0
    %629 = vmatpush1.msra.mxu0 0.0
    %630 = vmatprep.subr.mxu0 0.0
    %631 = vmatpush1.msra.mxu0 0.0
    %632 = vmatprep.subr.mxu0 0.0
    %633 = vmatpush1.msra.mxu0 0.0
    %634 = vmatprep.subr.mxu0 0.0
    %635 = vmatpush1.msra.mxu0 0.0
    %636 = vmatprep.subr.mxu0 0.0
    %637 = vmatpush1.msra.mxu0 0.0
    %638 = vmatprep.subr.mxu0 0.0
    %639 = vmatpush1.msra.mxu0 0.0
    %640 = vmatprep.subr.mxu0 0.0
    %641 = vmatpush1.msra.mxu0 0.0
    %642 = vmatprep.subr.mxu0 0.0
    %643 = vmatpush1.msra.mxu0 0.0
    %644 = vmatprep.subr.mxu0 0.0
    %645 = vmatpush1.msra.mxu0 0.0
    %646 = vmatprep.subr.mxu0 0.0
    %647 = vmatpush1.msra.mxu0 0.0
    %648 = vmatprep.subr.mxu0 0.0
    %649 = vmatpush1.msra.mxu0 0.0
    %650 = vmatprep.subr.mxu0 0.0
    %651 = vmatpush1.msra.mxu0 0.0
    %652 = vmatprep.subr.mxu0 0.0
    %653 = vmatpush1.msra.mxu0 0.0
    %654 = vmatprep.subr.mxu0 0.0
    %655 = vmatpush1.msra.mxu0 0.0
    %656 = vmatprep.subr.mxu0 0.0
    %657 = vmatpush1.msra.mxu0 0.0
    %658 = vmatprep.subr.mxu0 0.0
    %659 = vmatpush1.msra.mxu0 0.0
    %660 = vmatprep.subr.mxu0 0.0
    %661 = vmatpush1.msra.mxu0 0.0
    %662 = vmatprep.subr.mxu0 0.0
    %663 = vmatpush1.msra.mxu0 0.0
    %664 = vmatprep.subr.mxu0 0.0
    %665 = vmatpush1.msra.mxu0 0.0
    %666 = vmatprep.subr.mxu0 0.0
    %667 = vmatpush1.msra.mxu0 0.0
    %668 = vmatprep.subr.mxu0 0.0
    %669 = vmatpush1.msra.mxu0 0.0
    %670 = vmatprep.subr.mxu0 0.0
    %671 = vmatpush1.msra.mxu0 0.0
    %672 = vmatprep.subr.mxu0 0.0
    %673 = vmatpush1.msra.mxu0 0.0
    %674 = vmatprep.subr.mxu0 0.0
    %675 = vmatpush1.msra.mxu0 0.0
    %676 = vmatprep.subr.mxu0 0.0
    %677 = vmatpush1.msra.mxu0 0.0
    %678 = vmatprep.subr.mxu0 0.0
    %679 = vmatpush1.msra.mxu0 0.0
    %680 = vmatprep.mubr.f32.mxu0 0.0
    %681 = vmatmul.mubr.f32.gmra.mrb[0].mxu0 %v614
    %v682 = vpop.f32.mrb[0].mxu0
    %v683 = vadd.f32 0.0, %v682
    %v684 = vpop.f32.mrb[0].mxu0
    %685 = vdwg.mxu0
    %v686 = vadd.f32 %v612, %v683
    %v687 = vtanh.pop %v686
    %s688 = scalar_lea.vmem [#allocation2], 14
    %689 = vst.msk [vmem:[%s688] sm:$0x3] %vm135, %v687
    %690 = vst.msk [vmem:[#allocation9] sm:$0x3] %vm135, %v687
    %v691 = vld [vmem:[#allocation2] sm:$0x3]
    %v692 = vld [vmem:[#allocation2 + $0x2] sm:$0x3]
    %v693 = vld [vmem:[#allocation2 + $0x4] sm:$0x3]
    %v694 = vld [vmem:[#allocation2 + $0x6] sm:$0x3]
    %v695 = vld [vmem:[#allocation2 + $0x8] sm:$0x3]
    %v696 = vld [vmem:[#allocation2 + $0xa] sm:$0x3]
    %v697 = vld [vmem:[#allocation2 + $0xc] sm:$0x3]
    %v698 = vld [vmem:[#allocation2 + $0xe] sm:$0x3]
    %v699 = vld [vmem:[%s3] sm:$0x1]
    %v701 = vlaneseq
    %v702 = vshrl.u32 %v701, 7
    %v703 = vsub.s32 0, %v702
    %v704 = vrot.slane %v699, %v703
    %v706 = vmul.f32 %v691, %v704
    %v707 = vmul.f32 %v692, %v704
    %v708 = vmul.f32 %v693, %v704
    %v709 = vmul.f32 %v694, %v704
    %v710 = vmul.f32 %v695, %v704
    %v711 = vmul.f32 %v696, %v704
    %v712 = vmul.f32 %v697, %v704
    %v713 = vmul.f32 %v698, %v704
    %v714 = vsel %vm135, %v706, 0.0
    %715 = vadd.xlane.f32.xlu0 %v714
    %v716 = vpop.xlane.xlu0 %715
    %v717 = vsel %vm135, %v707, 0.0
    %718 = vadd.xlane.f32.xlu0 %v717
    %v719 = vpop.xlane.xlu0 %718
    %v720 = vsel %vm135, %v708, 0.0
    %721 = vadd.xlane.f32.xlu0 %v720
    %v722 = vpop.xlane.xlu0 %721
    %v723 = vsel %vm135, %v709, 0.0
    %724 = vadd.xlane.f32.xlu0 %v723
    %v725 = vpop.xlane.xlu0 %724
    %v726 = vsel %vm135, %v710, 0.0
    %727 = vadd.xlane.f32.xlu0 %v726
    %v728 = vpop.xlane.xlu0 %727
    %v729 = vsel %vm135, %v711, 0.0
    %730 = vadd.xlane.f32.xlu0 %v729
    %v731 = vpop.xlane.xlu0 %730
    %v732 = vsel %vm135, %v712, 0.0
    %733 = vadd.xlane.f32.xlu0 %v732
    %v734 = vpop.xlane.xlu0 %733
    %v735 = vsel %vm135, %v713, 0.0
    %736 = vadd.xlane.f32.xlu0 %v735
    %v737 = vpop.xlane.xlu0 %736
    %v738 = vld [vmem:[#allocation3] sm:$0x1]
    %v740 = vlaneseq
    %v741 = vshrl.u32 %v740, 7
    %v742 = vsub.s32 0, %v741
    %v743 = vrot.slane %v738, %v742
    %744 = vset.pattern.permute.xlu0 0
    %745 = vperm.xlu0 %744, %v743
    %v746 = vpop.permute.xlu0 %745
    %v748 = vadd.f32 %v716, %v746
    %v749 = vadd.f32 %v719, %v746
    %v750 = vadd.f32 %v722, %v746
    %v751 = vadd.f32 %v725, %v746
    %v752 = vadd.f32 %v728, %v746
    %v753 = vadd.f32 %v731, %v746
    %v754 = vadd.f32 %v734, %v746
    %v755 = vadd.f32 %v737, %v746
    %v764 = vlaneseq
    %v765 = vand.u32 %v764, 127
    %v766 = vlaneseq
    %v767 = vshrl.u32 %v766, 7
    %v768 = vsub.s32 %v765, %v767
    %v769 = vrot.slane %v748, %v768
    %v770 = vlaneseq
    %v771 = vshrl.u32 %v770, 7
    %v772 = vsub.s32 %v765, %v771
    %v773 = vrot.slane %v749, %v772
    %v774 = vlaneseq
    %v775 = vshrl.u32 %v774, 7
    %v776 = vsub.s32 %v765, %v775
    %v777 = vrot.slane %v750, %v776
    %v778 = vlaneseq
    %v779 = vshrl.u32 %v778, 7
    %v780 = vsub.s32 %v765, %v779
    %v781 = vrot.slane %v751, %v780
    %v782 = vlaneseq
    %v783 = vshrl.u32 %v782, 7
    %v784 = vsub.s32 %v765, %v783
    %v785 = vrot.slane %v752, %v784
    %v786 = vlaneseq
    %v787 = vshrl.u32 %v786, 7
    %v788 = vsub.s32 %v765, %v787
    %v789 = vrot.slane %v753, %v788
    %v790 = vlaneseq
    %v791 = vshrl.u32 %v790, 7
    %v792 = vsub.s32 %v765, %v791
    %v793 = vrot.slane %v754, %v792
    %v794 = vlaneseq
    %v795 = vshrl.u32 %v794, 7
    %v796 = vsub.s32 %v765, %v795
    %v797 = vrot.slane %v755, %v796
    %vm798 = vcmask 1041409
    %v799 = vsel %vm798, %v773, %v769
    %vm800 = vcmask 1042434
    %v801 = vsel %vm800, %v777, %v799
    %vm802 = vcmask 1043459
    %v803 = vsel %vm802, %v781, %v801
    %vm804 = vcmask 1044484
    %v805 = vsel %vm804, %v785, %v803
    %vm806 = vcmask 1045509
    %v807 = vsel %vm806, %v789, %v805
    %vm808 = vcmask 1046534
    %v809 = vsel %vm808, %v793, %v807
    %vm810 = vcmask 1047559
    %v811 = vsel %vm810, %v797, %v809
    %vm813 = vcmask 15360
    %814 = vst.msk [vmem:[%s5] sm:$0xff] %vm813, %v811
    // Predicated region
    $region30: #{tpu_custom_call.1} parent=1 // pred_check
      _
    $region31: #{tpu_custom_call.1} parent=1 // pred_check_branch
      %816 = sbr.rel (0) target = $region33
    $region32: #{tpu_custom_call.1} parent=1 // pred_region
      _
    $region33: #{tpu_custom_call.1} parent=1 // pred_fallthru
      _
    // Predicated region
    $region34: #{tpu_custom_call.1} parent=1 // pred_check
      _
    $region35: #{tpu_custom_call.1} parent=1 // pred_check_branch
      %818 = sbr.rel (0) target = $region37
    $region36: #{tpu_custom_call.1} parent=1 // pred_region
      %s820 = ssub.s32 32, 32
      %821 = vsyncadd [#allocation6], %s820
      %s823 = sshll.u32 [#allocation9], 4
      %s824 = int_to_ptr.vmem [resolvable:$true] %s823
      %826 = dma.vmem_to_hbm [thread:$0]  %s824, 32, %s6, [#allocation6]
    $region37: #{tpu_custom_call.1} parent=1 // pred_fallthru
      _
    // Predicated region
    $region38: #{tpu_custom_call.1} parent=1 // pred_check
      _
    $region39: #{tpu_custom_call.1} parent=1 // pred_check_branch
      %828 = sbr.rel (0) target = $region41
    $region40: #{tpu_custom_call.1} parent=1 // pred_region
      _
    $region41: #{tpu_custom_call.1} parent=1 // pred_fallthru
      _
    // Predicated region
    $region42: #{tpu_custom_call.1} parent=1 // pred_check
      _
    $region43: #{tpu_custom_call.1} parent=1 // pred_check_branch
      %830 = sbr.rel (0) target = $region45
    $region44: #{tpu_custom_call.1} parent=1 // pred_region
      %831 = dma.done [#allocation6], 32
    $region45: #{tpu_custom_call.1} parent=1 // pred_fallthru
      _
    %832 = vsyncpa [#allocation5], 1
    %833 = vsyncpa [#allocation8], 1
    %834 = vsyncpa [#allocation6], 1

</llo_original>
